<compile_context>
chip_gen: v5e
topology: v5e:2x2
jax: 0.10.0
libtpu: 0.0.40
codegen_flags: <defaults>
</compile_context>

<pallas_src>
import functools

import jax
import jax.numpy as jnp
from jax.experimental import pallas as pl
from jax.experimental.pallas import tpu as pltpu

_EPS = 1e-6
_VMEM_LIMIT_BYTES = 32 * 1024 * 1024   # safe scoped-VMEM target on v5e/v6e/v7x
_X_TILE_BYTES = 4 * 1024 * 1024        # per x-tile budget (x2 for double-buffer)


def _round_up(x, m):
    return (x + m - 1) // m * m


def _cdiv(a, b):
    return -(-a // b)


def _choose_tiles(b, n, c, itemsize):
    """Pick (tb, tn, n_pad) for the (B, N, C) pooling grid."""
    tb = b if b <= 8 else 8                # full batch if it fits one out block
    if tb * n * c * itemsize <= _X_TILE_BYTES:
        # Whole point axis resident: single reduction step, no N padding.
        # (block dim == full array dim satisfies the (8,128) rule.)
        return tb, n, n
    max_tn = max(8, (_X_TILE_BYTES // (tb * c * itemsize)) // 8 * 8)
    num_k = _cdiv(_round_up(n, 8), max_tn)
    tn = _round_up(_cdiv(n, num_k), 8)     # minimal padding: n_pad - n <= 8*num_k
    return tb, tn, tn * num_k


def _concrete_float(p):
    """float(p) if p is a compile-time constant, else None (traced p)."""
    try:
        return float(p)
    except (TypeError,
            jax.errors.ConcretizationTypeError,
            jax.errors.TracerArrayConversionError):
        return None


# ---------------------------------------------------------------------------
# Kernel factories
# ---------------------------------------------------------------------------
def _make_mac_kernel():
    def kernel(x_ref, o_ref, acc_ref):
        k = pl.program_id(1)

        @pl.when(k == 0)
        def _():
            acc_ref[...] = jnp.full_like(acc_ref, -jnp.inf)

        # Reduce the (TB, TN, C) tile in the input dtype, widen only (TB, C).
        tile_max = jnp.max(x_ref[...], axis=1)
        acc_ref[...] = jnp.maximum(acc_ref[...], tile_max.astype(jnp.float32))

        @pl.when(k == pl.num_programs(1) - 1)
        def _():
            o_ref[...] = acc_ref[...].astype(o_ref.dtype)

    return kernel


def _make_avg_kernel(*, inv_n):
    def kernel(x_ref, o_ref, acc_ref):
        k = pl.program_id(1)

        @pl.when(k == 0)
        def _():
            acc_ref[...] = jnp.zeros_like(acc_ref)

        acc_ref[...] += jnp.sum(x_ref[...].astype(jnp.float32), axis=1)

        @pl.when(k == pl.num_programs(1) - 1)
        def _():
            o_ref[...] = (acc_ref[...] * inv_n).astype(o_ref.dtype)

    return kernel


def _int_pow(x, n):
    # x**n with static positive int n: VPU multiplies only (no EUP exp/log).
    acc = x
    for _ in range(int(n) - 1):
        acc = acc * x
    return acc


def _make_gem_kernel(*, p_static, inv_n, n_pad_rows, with_linear, dynamic_p):
    """GeM (optionally + Linear) kernel.

    p_static : Python float if p is a compile-time constant, else None.
    dynamic_p: if True, p arrives as a (1, 1) SMEM scalar (learnable/traced p).
    """

    def body(p, x_ref, w_ref, b_ref, o_ref, acc_ref):
        k = pl.program_id(1)

        @pl.when(k == 0)
        def _():
            acc_ref[...] = jnp.zeros_like(acc_ref)

        xc = jnp.maximum(x_ref[...].astype(jnp.float32), _EPS)
        if (not dynamic_p) and float(p_static) == round(p_static) and p_static >= 1:
            xp = _int_pow(xc, round(p_static))        # default p=3: VPU fast path
        else:
            xp = jnp.exp(p * jnp.log(xc))             # EUP path (non-int/traced p)
        acc_ref[...] += jnp.sum(xp, axis=1)

        @pl.when(k == pl.num_programs(1) - 1)
        def _():
            acc = acc_ref[...]
            if n_pad_rows:
                # Padded point rows were zeros -> each contributed eps**p after
                # the clamp; subtract exactly instead of masking the hot loop.
                if dynamic_p:
                    acc = acc - n_pad_rows * jnp.exp(p * jnp.log(jnp.float32(_EPS)))
                else:
                    acc = acc - jnp.float32(n_pad_rows * (float(_EPS) ** float(p_static)))
            m = acc * inv_n                            # (TB, C)
            if dynamic_p:
                g = jnp.exp(jnp.log(m) / p)            # m ** (1/p)
            else:
                g = jnp.exp(jnp.log(m) * (1.0 / float(p_static)))
            if with_linear:
                y = jnp.dot(g, w_ref[...].astype(jnp.float32),
                            preferred_element_type=jnp.float32) + b_ref[...]
                o_ref[...] = y.astype(o_ref.dtype)
            else:
                o_ref[...] = g.astype(o_ref.dtype)

    if dynamic_p and with_linear:
        def kernel(p_ref, x_ref, w_ref, b_ref, o_ref, acc_ref):
            body(p_ref[0, 0], x_ref, w_ref, b_ref, o_ref, acc_ref)
    elif dynamic_p:
        def kernel(p_ref, x_ref, o_ref, acc_ref):
            body(p_ref[0, 0], x_ref, None, None, o_ref, acc_ref)
    elif with_linear:
        def kernel(x_ref, w_ref, b_ref, o_ref, acc_ref):
            body(float(p_static), x_ref, w_ref, b_ref, o_ref, acc_ref)
    else:
        def kernel(x_ref, o_ref, acc_ref):
            body(float(p_static), x_ref, None, None, o_ref, acc_ref)
    return kernel


# ---------------------------------------------------------------------------
# pallas_call wrapper (shared tiling / padding / grid)
# ---------------------------------------------------------------------------
def _pooled_call(kernel_factory, x, out_dim, *, pad_value, pre=(), post=()):
    """Run a batch-parallel, point-reduction pooling grid.

    kernel_factory(n_pad_rows=...) -> kernel body.
    pre / post: sequences of (array, BlockSpec) passed before / after x.
    """
    B, N, C = x.shape
    tb, tn, n_pad = _choose_tiles(B, N, C, x.dtype.itemsize)
    b_pad = _round_up(B, tb)
    padded = (b_pad, n_pad) != (B, N)
    if padded:
        x = jnp.pad(x, ((0, b_pad - B), (0, n_pad - N), (0, 0)),
                    constant_values=pad_value)

    kernel = kernel_factory(n_pad_rows=n_pad - N)

    pre_args = [a for a, _ in pre]
    post_args = [a for a, _ in post]
    in_specs = ([s for _, s in pre]
                + [pl.BlockSpec((tb, tn, C), lambda b, k: (b, k, 0))]
                + [s for _, s in post])

    out = pl.pallas_call(
        kernel,
        out_shape=jax.ShapeDtypeStruct((b_pad, out_dim), x.dtype),
        grid=(b_pad // tb, n_pad // tn),
        in_specs=in_specs,
        out_specs=pl.BlockSpec((tb, out_dim), lambda b, k: (b, 0)),
        scratch_shapes=[pltpu.VMEM((tb, C), jnp.float32)],
        compiler_params=pltpu.CompilerParams(
            dimension_semantics=("parallel", "arbitrary"),
            vmem_limit_bytes=_VMEM_LIMIT_BYTES),
    )(*pre_args, x, *post_args)
    return out[:B] if b_pad != B else out


def _gem_forward(x, p, w, bias, output_dim):
    """GeM / GeMLinear forward (w/bias None -> plain GeM)."""
    _, n, c = x.shape
    with_linear = w is not None
    p_static = _concrete_float(p)
    dynamic_p = p_static is None
    out_dim = output_dim if with_linear else c

    pre, post = [], []
    if dynamic_p:
        p2 = jnp.reshape(jnp.asarray(p, jnp.float32), (1, 1))
        pre.append((p2, pl.BlockSpec((1, 1), lambda b, k: (0, 0),
                                     memory_space=pltpu.MemorySpace.SMEM)))
    if with_linear:
        post.append((w, pl.BlockSpec((c, out_dim), lambda b, k: (0, 0))))
        post.append((jnp.reshape(bias.astype(jnp.float32), (1, out_dim)),
                     pl.BlockSpec((1, out_dim), lambda b, k: (0, 0))))

    factory = functools.partial(
        _make_gem_kernel, p_static=p_static, inv_n=1.0 / n,
        with_linear=with_linear, dynamic_p=dynamic_p)
    return _pooled_call(factory, x, out_dim, pad_value=0.0, pre=pre, post=post)


# ---------------------------------------------------------------------------
# PoolingWrapper (mirrors the PyTorch module's dispatch)
# ---------------------------------------------------------------------------
class PoolingWrapper:
    def __init__(self, pool_method, in_dim, output_dim, key=None):
        self.pool_method = pool_method
        self.in_dim = in_dim
        self.output_dim = output_dim
        key = jax.random.PRNGKey(42) if key is None else key

        if pool_method == "MAC":
            assert in_dim == output_dim
        elif pool_method in ("SPoC", "GAP", "Avg", "Avgt"):
            if pool_method in ("SPoC", "GAP"):
                assert in_dim == output_dim
        elif pool_method in ("GeM", "GeMt"):
            assert in_dim == output_dim
            self.p = jnp.asarray(3.0, jnp.float32)          # GeM default p=3
        elif pool_method == "GeMLinear":
            self.p = jnp.asarray(3.0, jnp.float32)
            kw, _ = jax.random.split(key)
            bound = 1.0 / float(in_dim) ** 0.5
            # nn.Linear(in_dim, output_dim): weight (out, in) -> store as (in, out)
            self.w = jax.random.uniform(
                kw, (in_dim, output_dim), jnp.float32, -bound, bound)
            self.b = jnp.zeros((output_dim,), jnp.float32)
        elif pool_method in ("netvlad", "netvladgc"):
            # TODO(synk): NetVLADWrapper (soft-assignment VLAD + optional gating)
            raise NotImplementedError(pool_method)
        else:
            raise NotImplementedError(
                "Unknown pooling method: {}".format(pool_method))

    def __call__(self, x):
        # x: (B, N, C) dense stand-in for the ME.SparseTensor features
        assert x.ndim == 3 and x.shape[-1] == self.in_dim
        m = self.pool_method
        if m == "MAC":
            return _pooled_call(lambda n_pad_rows: _make_mac_kernel(),
                                x, self.in_dim,
                                pad_value=float(jnp.finfo(x.dtype).min))
        if m in ("SPoC", "GAP", "Avg", "Avgt"):
            return _pooled_call(
                lambda n_pad_rows: _make_avg_kernel(inv_n=1.0 / x.shape[1]),
                x, self.in_dim, pad_value=0.0)
        if m in ("GeM", "GeMt"):
            return _gem_forward(x, self.p, None, None, self.output_dim)
        if m == "GeMLinear":
            return _gem_forward(x, self.p, self.w, self.b, self.output_dim)
        raise NotImplementedError(m)


# ---------------------------------------------------------------------------
if __name__ == "__main__":
    key = jax.random.PRNGKey(0)
    B, N, C = 2, 16, 128
    x = jax.random.normal(key, (B, N, C), jnp.float32) + 0.5

    # GeM (MinkLoc3Dv2 default) -- static p=3 integer-power fast path,
    # single-step (TN = N) reduction, no padding.
    gem = PoolingWrapper("GeM", in_dim=C, output_dim=C)
    out_gem = jax.block_until_ready(gem(x))
    ref_gem = jnp.mean(jnp.maximum(x, _EPS) ** 3.0, axis=1) ** (1.0 / 3.0)
    assert out_gem.shape == (B, C)
    assert jnp.allclose(out_gem, ref_gem, rtol=1e-4, atol=1e-4)

    # GeM with a traced (learnable) p -> dynamic SMEM-scalar exp/log path.
    p_dyn = jnp.asarray(3.0, jnp.float32)
    out_dyn = jax.block_until_ready(
        jax.jit(lambda xx, pp: _gem_forward(xx, pp, None, None, C))(x, p_dyn))
    assert jnp.allclose(out_dyn, ref_gem, rtol=1e-4, atol=1e-4)

    # MAC (f32 and bf16 inputs; bf16 halves HBM traffic, accumulates in f32).
    mac = PoolingWrapper("MAC", in_dim=C, output_dim=C)
    out_mac = jax.block_until_ready(mac(x))
    assert jnp.allclose(out_mac, jnp.max(x, axis=1), rtol=1e-5, atol=1e-5)
    xb = x.astype(jnp.bfloat16)
    out_mac_b = jax.block_until_ready(mac(xb))
    assert jnp.allclose(out_mac_b.astype(jnp.float32),
                        jnp.max(xb, axis=1).astype(jnp.float32))

    # Avg / SPoC / GAP.
    avg = PoolingWrapper("Avg", in_dim=C, output_dim=C)
    out_avg = jax.block_until_ready(avg(x))
    assert jnp.allclose(out_avg, jnp.mean(x, axis=1), rtol=1e-5, atol=1e-5)

    # GeMLinear: GeM + one batched (TB, C) @ (C, D) matmul at finalize.
    gml = PoolingWrapper("GeMLinear", in_dim=C, output_dim=128)
    out_gml = jax.block_until_ready(gml(x))
    ref_gml = ref_gem @ gml.w + gml.b
    assert out_gml.shape == (B, 128)
    assert jnp.allclose(out_gml, ref_gml, rtol=1e-3, atol=1e-3)

    # Larger, non-divisible shapes (B=9 > 8, ragged N) exercise the tiled N
    # reduction, batch + point padding, and the exact eps**p padding correction.
    x2 = jax.random.normal(jax.random.PRNGKey(1), (9, 1150, 128), jnp.float32) + 0.5
    out2 = jax.block_until_ready(gem(x2))
    ref2 = jnp.mean(jnp.maximum(x2, _EPS) ** 3.0, axis=1) ** (1.0 / 3.0)
    assert out2.shape == (9, C)
    assert jnp.allclose(out2, ref2, rtol=1e-4, atol=1e-4)
    out2m = jax.block_until_ready(mac(x2))
    assert jnp.allclose(out2m, jnp.max(x2, axis=1), rtol=1e-5, atol=1e-5)

    # Mid-size case (3, 2500, 128) fits a single (TB, N, C) block -> no point
    # padding and no pad copy at all.
    x3 = jax.random.normal(jax.random.PRNGKey(2), (3, 2500, 128), jnp.float32) + 0.5
    out3 = jax.block_until_ready(gem(x3))
    ref3 = jnp.mean(jnp.maximum(x3, _EPS) ** 3.0, axis=1) ** (1.0 / 3.0)
    assert out3.shape == (3, C)
    assert jnp.allclose(out3, ref3, rtol=1e-4, atol=1e-4)

    print("KERNEL_OK")
</pallas_src>

<mosaic_0001>
module attributes {stable_mosaic.version = 11 : i64} {
  func.func @kernel(%arg0: i32, %arg1: i32, %arg2: memref<2x16x128xf32, #tpu.memory_space<vmem>>, %arg3: memref<2x128xf32, #tpu.memory_space<vmem>>, %arg4: memref<2x128xf32, #tpu.memory_space<vmem>>) attributes {dimension_semantics = [#tpu.dimension_semantics<parallel>, #tpu.dimension_semantics<arbitrary>], iteration_bounds = array<i64: 1, 1>, scalar_prefetch = 0 : i64, scratch_operands = 1 : i64, tpu.core_type = #tpu.core_type<tc>, window_params = [{transform_indices = @transform_0, window_bounds = array<i64: 2, 16, 128>}, {transform_indices = @transform_1, window_bounds = array<i64: 2, 128>}]} {
    %c0_i32 = arith.constant 0 : i32
    %0 = arith.cmpi eq, %arg1, %c0_i32 : i32
    %1 = arith.extui %0 : i1 to i32
    %c0_i32_0 = arith.constant 0 : i32
    %2 = arith.cmpi ne, %1, %c0_i32_0 : i32
    scf.if %2 {
      %cst_10 = arith.constant 0.000000e+00 : f32
      %15 = vector.broadcast %cst_10 : f32 to vector<2x128xf32>
      %c0_11 = arith.constant 0 : index
      %c0_12 = arith.constant 0 : index
      %16 = vector.load %arg4[%c0_11, %c0_12] : memref<2x128xf32, #tpu.memory_space<vmem>>, vector<2x128xf32>
      tpu.vector_store %arg4[%c0_11, %c0_12], %15 {strides = array<i32>} : memref<2x128xf32, #tpu.memory_space<vmem>>, vector<2x128xf32>,
    } else {
    }
    %c0 = arith.constant 0 : index
    %c0_1 = arith.constant 0 : index
    %c0_2 = arith.constant 0 : index
    %3 = vector.load %arg2[%c0, %c0_1, %c0_2] : memref<2x16x128xf32, #tpu.memory_space<vmem>>, vector<2x16x128xf32>
    %cst = arith.constant 9.99999997E-7 : f32
    %4 = vector.broadcast %cst : f32 to vector<2x16x128xf32>
    %5 = arith.maximumf %3, %4 : vector<2x16x128xf32>
    %6 = arith.mulf %5, %5 : vector<2x16x128xf32>
    %7 = arith.mulf %6, %5 : vector<2x16x128xf32>
    %c0_3 = arith.constant 0 : index
    %c0_4 = arith.constant 0 : index
    %8 = vector.load %arg4[%c0_3, %c0_4] : memref<2x128xf32, #tpu.memory_space<vmem>>, vector<2x128xf32>
    %cst_5 = arith.constant dense<0.000000e+00> : vector<2x128xf32>
    %9 = vector.multi_reduction <add>, %7, %cst_5 [1] : vector<2x16x128xf32> to vector<2x128xf32>
    %10 = arith.addf %8, %9 : vector<2x128xf32>
    %c0_6 = arith.constant 0 : index
    %c0_7 = arith.constant 0 : index
    %11 = vector.load %arg4[%c0_6, %c0_7] : memref<2x128xf32, #tpu.memory_space<vmem>>, vector<2x128xf32>
    tpu.vector_store %arg4[%c0_6, %c0_7], %10 {strides = array<i32>} : memref<2x128xf32, #tpu.memory_space<vmem>>, vector<2x128xf32>,
    %c0_i32_8 = arith.constant 0 : i32
    %12 = arith.cmpi eq, %arg1, %c0_i32_8 : i32
    %13 = arith.extui %12 : i1 to i32
    %c0_i32_9 = arith.constant 0 : i32
    %14 = arith.cmpi ne, %13, %c0_i32_9 : i32
    scf.if %14 {
      %c0_10 = arith.constant 0 : index
      %c0_11 = arith.constant 0 : index
      %15 = vector.load %arg4[%c0_10, %c0_11] : memref<2x128xf32, #tpu.memory_space<vmem>>, vector<2x128xf32>
      %cst_12 = arith.constant 6.250000e-02 : f32
      %16 = vector.broadcast %cst_12 : f32 to vector<2x128xf32>
      %17 = arith.mulf %15, %16 : vector<2x128xf32>
      %18 = math.log %17 : vector<2x128xf32>
      %cst_13 = arith.constant 0.333333343 : f32
      %19 = vector.broadcast %cst_13 : f32 to vector<2x128xf32>
      %20 = arith.mulf %18, %19 : vector<2x128xf32>
      %21 = math.exp %20 : vector<2x128xf32>
      %c0_14 = arith.constant 0 : index
      %c0_15 = arith.constant 0 : index
      %22 = vector.load %arg3[%c0_14, %c0_15] : memref<2x128xf32, #tpu.memory_space<vmem>>, vector<2x128xf32>
      tpu.vector_store %arg3[%c0_14, %c0_15], %21 {strides = array<i32>} : memref<2x128xf32, #tpu.memory_space<vmem>>, vector<2x128xf32>,
    } else {
    }
    return
  }
  func.func @transform_0(%arg0: i32, %arg1: i32) -> (i32, i32, i32) {
    %c0_i32 = arith.constant 0 : i32
    %c0_i32_0 = arith.constant 0 : i32
    return %arg0, %arg1, %c0_i32 : i32, i32, i32
  }
  func.func @transform_1(%arg0: i32, %arg1: i32) -> (i32, i32) {
    %c0_i32 = arith.constant 0 : i32
    %c0_i32_0 = arith.constant 0 : i32
    return %arg0, %c0_i32 : i32, i32
  }
}

</mosaic_0001>

<llo_original>
// kernel: tpu_custom_call.1
$region0: #{tpu_custom_call.1}
  #allocation0 [shape = 'u32[]', space=smem, size = 0x4, offset = 0x4, fixed_abs, tag = 'smem constant byte address 0x4 - core index']
  #allocation1 [shape = 'u32[72,128]{1,0:T(1,128)}', space=vmem, size = 0x9000, scoped, tag = 'internal scratch']
  #allocation2 [shape = 'f32[2,128]{1,0:T(2,128)}', space=vmem, size = 0x400, scoped, tag = 'scratch operand']
  %s0 = inlined_call_operand.hbm [shape: f32[2,16,128], index: 0, kind: input, shape index: {}]
  %s1 = inlined_call_operand.hbm [shape: f32[2,128], index: 1, kind: output, shape index: {}]
  %s2 = sld [smem:[#allocation0]]
  $region26: #{tpu_custom_call.1} parent=0
    _
  %s4 = ssub.s32 1, %s2
  %s5 = scalar_select 0, %s4, %s2
  $region1: #{tpu_custom_call.1} parent=0
    #allocation3 [shape = 'u8[16384]{0}', space=vmem, size = 0x4000, scoped, tag = 'input window, operand 0, single buffered']
    #allocation4 [shape = 's32[1]{0}', space=sflag, size = 0x4, scoped, tag = 'scoped memory for tpu_custom_call.1']
    #allocation5 [shape = 's32[1]{0}', space=sflag, size = 0x4, scoped, tag = 'scoped memory for tpu_custom_call.1']
    #allocation6 [shape = 'u8[1024]{0}', space=vmem, size = 0x400, scoped, tag = 'output window, operand 0, single buffered']
    %6 = vsyncpa [#allocation4], 0
    %7 = vsyncpa [#allocation5], 0
    // Predicated region
    $region2: #{tpu_custom_call.1} parent=1 // pred_check
      _
    $region3: #{tpu_custom_call.1} parent=1 // pred_check_branch
      %9 = sbr.rel (0) target = $region5
    $region4: #{tpu_custom_call.1} parent=1 // pred_region
      %11 = vsyncadd [#allocation4], 0
      %s12 = sshll.u32 %s0, 4
      %s13 = int_to_ptr.hbm [resolvable:$true] %s12
      %s14 = sshll.u32 [#allocation3], 4
      %s15 = int_to_ptr.vmem [resolvable:$true] %s14
      %20 = dma.hbm_to_vmem [thread:$0]  %s13, 512, %s15, [#allocation4], 128, 128, 8
    $region5: #{tpu_custom_call.1} parent=1 // pred_fallthru
      _
    // Predicated region
    $region6: #{tpu_custom_call.1} parent=1 // pred_check
      _
    $region7: #{tpu_custom_call.1} parent=1 // pred_check_branch
      %22 = sbr.rel (0) target = $region9
    $region8: #{tpu_custom_call.1} parent=1 // pred_region
      %24 = dma.done [#allocation4], 512
    $region9: #{tpu_custom_call.1} parent=1 // pred_fallthru
      _
    %p25 = scmp.eq.s32.totalorder 0, 0
    // Predicated region
    $region10: #{tpu_custom_call.1} parent=1 // pred_check
      %p26 = pneg %p25
    $region11: #{tpu_custom_call.1} parent=1 // pred_check_branch
      %28 = sbr.rel (%p26) target = $region13
    $region12: #{tpu_custom_call.1} parent=1 // pred_region
      %29 = vst [vmem:[#allocation2] sm:$0x3] 0.0
    $region13: #{tpu_custom_call.1} parent=1 // pred_fallthru
      _
    %v30 = vld [vmem:[#allocation3] sm:$0xff]
    %v31 = vld [vmem:[#allocation3 + $0x8] sm:$0xff]
    %v32 = vld [vmem:[#allocation3 + $0x10] sm:$0xff]
    %v33 = vld [vmem:[#allocation3 + $0x18] sm:$0xff]
    %v34 = vmax.f32 %v30, 1e-06
    %v35 = vmax.f32 %v31, 1e-06
    %v36 = vmax.f32 %v32, 1e-06
    %v37 = vmax.f32 %v33, 1e-06
    %v38 = vmul.f32 %v34, %v34
    %v39 = vmul.f32 %v35, %v35
    %v40 = vmul.f32 %v36, %v36
    %v41 = vmul.f32 %v37, %v37
    %v42 = vmul.f32 %v38, %v34
    %v43 = vmul.f32 %v39, %v35
    %v44 = vmul.f32 %v40, %v36
    %v45 = vmul.f32 %v41, %v37
    %v46 = vld [vmem:[#allocation2] sm:$0x3]
    %v47 = vadd.f32 %v42, %v43
    %v48 = vrot.slane %v47, 4
    %v49 = vadd.f32 %v47, %v48
    %v50 = vrot.slane %v49, 2
    %v51 = vadd.f32 %v49, %v50
    %v52 = vrot.slane %v51, 1
    %v53 = vadd.f32 %v51, %v52
    %v54 = vadd.f32 %v44, %v45
    %v55 = vrot.slane %v54, 4
    %v56 = vadd.f32 %v54, %v55
    %v57 = vrot.slane %v56, 2
    %v58 = vadd.f32 %v56, %v57
    %v59 = vrot.slane %v58, 1
    %v60 = vadd.f32 %v58, %v59
    %vm63 = vcmask 1041409
    %v64 = vsel %vm63, %v60, %v53
    %v66 = vadd.f32 %v46, %v64
    %67 = vst [vmem:[#allocation2] sm:$0x3] %v66
    // Predicated region
    $region14: #{tpu_custom_call.1} parent=1 // pred_check
      %p68 = pneg %p25
    $region15: #{tpu_custom_call.1} parent=1 // pred_check_branch
      %70 = sbr.rel (%p68) target = $region17
    $region16: #{tpu_custom_call.1} parent=1 // pred_region
      %v71 = vld [vmem:[#allocation2] sm:$0x3]
      %v72 = vmul.f32 %v71, 0.0625
      %v73 = vlog2.pop %v72
      %v74 = vmul.f32 %v73, 0.6931472
      %v75 = vmul.f32 %v74, 0.33333334
      %v76 = vmul.f32 %v75, 1.442695
      %v77 = vpow.pop %v76
      %78 = vst [vmem:[#allocation6] sm:$0x3] %v77
    $region17: #{tpu_custom_call.1} parent=1 // pred_fallthru
      _
    // Predicated region
    $region18: #{tpu_custom_call.1} parent=1 // pred_check
      _
    $region19: #{tpu_custom_call.1} parent=1 // pred_check_branch
      %80 = sbr.rel (0) target = $region21
    $region20: #{tpu_custom_call.1} parent=1 // pred_region
      %82 = vsyncadd [#allocation5], 0
      %s84 = sshll.u32 [#allocation6], 4
      %s85 = int_to_ptr.vmem [resolvable:$true] %s84
      %s86 = sshll.u32 %s1, 4
      %s87 = int_to_ptr.hbm [resolvable:$true] %s86
      %89 = dma.vmem_to_hbm [thread:$0]  %s85, 32, %s87, [#allocation5]
    $region21: #{tpu_custom_call.1} parent=1 // pred_fallthru
      _
    // Predicated region
    $region22: #{tpu_custom_call.1} parent=1 // pred_check
      _
    $region23: #{tpu_custom_call.1} parent=1 // pred_check_branch
      %91 = sbr.rel (0) target = $region25
    $region24: #{tpu_custom_call.1} parent=1 // pred_region
      %93 = dma.done [#allocation5], 32
    $region25: #{tpu_custom_call.1} parent=1 // pred_fallthru
      _
    %94 = vsyncpa [#allocation4], 1
    %95 = vsyncpa [#allocation5], 1

</llo_original>
